<compile_context>
chip_gen: v7x
topology: tpu7x:2x2x1
jax: 0.10.0
libtpu: 0.0.40
codegen_flags: <defaults>
</compile_context>

<pallas_src>
import numpy as np
import jax
import jax.numpy as jnp
from jax import lax
from jax.experimental import pallas as pl
from jax.experimental.pallas import tpu as pltpu


def _make_kernel(n_shared, n_branch, n_total, tb, h_split, matmul_dtype):
    """Build the fused NeuralComplex kernel.

    Ref order:
      e1_ref, e2_ref : (tb, Din) batch tiles of emb1 / emb2
      weights        : (W, b) pairs in order:
                         shared[0..n_shared)            -- trunk
                         fused first branch layer       -- [W1_0 | W2_0]
                         layers1[1..n_branch)           -- branch-1 tail
                         layers2[1..n_branch)           -- branch-2 tail
      out_ref        : (1, 1, tb) lane-dense log-prob row for this tile
    """

    def kernel(e1_ref, e2_ref, *refs):
        out_ref = refs[-1]
        w_refs = refs[:-1]

        def linear(h, widx):
            W = w_refs[2 * widx][...]          # stored in matmul_dtype
            b = w_refs[2 * widx + 1][...]      # f32
            return jnp.dot(h.astype(matmul_dtype), W,
                           preferred_element_type=jnp.float32) + b

        # Stack [emb1_tile ; emb2_tile]: every MLP below runs ONCE on both.
        x = jnp.concatenate([e1_ref[...], e2_ref[...]], axis=0)   # (2tb, Din)

        # Shared trunk.
        for s in range(n_shared):
            x = linear(x, s)
            if s < n_total - 1:
                x = jnp.maximum(x, 0.0)        # ReLU; Dropout(p=0.0) -> identity
        # TODO(synk): stochastic dropout (p > 0) not implemented; module default p=0.0.

        if n_branch >= 1:
            # First layer of BOTH branches fused into one matmul with
            # Wf = [W1_0 | W2_0] (Din, 2*h_split); split along lanes after.
            h = linear(x, n_shared)                               # (2tb, 2*h_split)
            if n_branch > 1:
                h = jnp.maximum(h, 0.0)
            h1 = h[:, :h_split]
            h2 = h[:, h_split:]
            base1 = n_shared + 1
            base2 = n_shared + n_branch
            for k in range(1, n_branch):
                h1 = linear(h1, base1 + k - 1)
                if k < n_branch - 1:
                    h1 = jnp.maximum(h1, 0.0)
            for k in range(1, n_branch):
                h2 = linear(h2, base2 + k - 1)
                if k < n_branch - 1:
                    h2 = jnp.maximum(h2, 0.0)
        else:
            h1 = x
            h2 = x

        e11, e21 = h1[:tb], h1[tb:]
        e12, e22 = h2[:tb], h2[tb:]

        # score = <e11,e21> + <e12,e22> + <e11,e22> - <e12,e21>
        #       = sum(e11*(e21+e22) + e12*(e22-e21), axis=-1)
        prod = e11 * (e21 + e22) + e12 * (e22 - e21)              # (tb, Dout) f32

        # Reduction + transpose in one MXU op -> lane-dense (1, tb) output row.
        ones_row = jnp.ones((1, prod.shape[-1]), jnp.float32)
        score = lax.dot_general(
            ones_row, prod,
            dimension_numbers=(((1,), (1,)), ((), ())),
            preferred_element_type=jnp.float32)                   # (1, tb)

        # log(sigmoid(score) + 1e-20): single EUP exp, no overflow on either
        # side of the select (exp argument is always <= 0).
        z = jnp.exp(-jnp.abs(score))
        sig = jnp.where(score >= 0.0, 1.0 / (1.0 + z), z / (1.0 + z))
        out_ref[0] = jnp.log(sig + 1e-20)                         # unmasked vst

    return kernel


def neural_complex_forward(idx1, idx2, emb1, emb2, params, *,
                           tile_batch=1024, matmul_dtype=jnp.bfloat16):
    """Pallas forward for NeuralComplex.

    params = {"shared": [(W,b)...], "layers1": [(W,b)...], "layers2": [(W,b)...]}
    with W: [in_features, out_features], b: [1, out_features].
    """
    del idx1, idx2  # unused by the reference forward as well

    shared = list(params.get("shared", []))
    layers1 = list(params["layers1"])
    layers2 = list(params["layers2"])
    assert len(layers1) == len(layers2)
    n_shared, n_branch = len(shared), len(layers1)
    n_total = n_shared + n_branch

    B, Din = emb1.shape
    emb1 = emb1.astype(jnp.float32)
    emb2 = emb2.astype(jnp.float32)

    # ---- batch-tile selection ------------------------------------------------
    # Multiple of 128 -> unmasked lane-dense stores and aligned row/lane splits.
    # Keep the grid >= 2 steps when possible so v7x megacore uses both TCs.
    if B <= 128:
        tb = B
    else:
        tb = min(int(tile_batch), B)
        tb = max(128, (tb // 128) * 128)
        if pl.cdiv(B, tb) < 2:
            tb = max(128, ((pl.cdiv(B, 2) + 127) // 128) * 128)
    nt = pl.cdiv(B, tb)

    # ---- flatten weights (tiny one-time wrapper ops) --------------------------
    flat = []
    in_specs = [pl.BlockSpec((tb, Din), lambda i: (i, 0)),
                pl.BlockSpec((tb, Din), lambda i: (i, 0))]

    def add_pair(W, b):
        W = jnp.asarray(W, jnp.float32).astype(matmul_dtype)
        b = jnp.asarray(b, jnp.float32).reshape(1, -1)
        flat.extend([W, b])
        # Constant index_map -> fetched once, stays VMEM-resident across steps.
        in_specs.append(pl.BlockSpec(W.shape, lambda i: (0, 0)))
        in_specs.append(pl.BlockSpec(b.shape, lambda i: (0, 0)))

    for (W, b) in shared:
        add_pair(W, b)
    if n_branch >= 1:
        W10, b10 = layers1[0]
        W20, b20 = layers2[0]
        h_split = int(W10.shape[1])
        add_pair(jnp.concatenate([jnp.asarray(W10, jnp.float32),
                                  jnp.asarray(W20, jnp.float32)], axis=1),
                 jnp.concatenate([jnp.asarray(b10, jnp.float32).reshape(1, -1),
                                  jnp.asarray(b20, jnp.float32).reshape(1, -1)],
                                 axis=1))
        for (W, b) in layers1[1:]:
            add_pair(W, b)
        for (W, b) in layers2[1:]:
            add_pair(W, b)
    else:
        h_split = Din

    kernel = _make_kernel(n_shared, n_branch, n_total, tb, h_split, matmul_dtype)

    out = pl.pallas_call(
        kernel,
        out_shape=jax.ShapeDtypeStruct((nt, 1, tb), jnp.float32),
        grid=(nt,),
        in_specs=in_specs,
        out_specs=pl.BlockSpec((1, 1, tb), lambda i: (i, 0, 0)),
        compiler_params=pltpu.CompilerParams(
            dimension_semantics=("parallel",),
            vmem_limit_bytes=48 * 1024 * 1024),
    )(emb1, emb2, *flat)
    # Rows beyond B (ragged last tile) contain garbage and are sliced off here.
    return out.reshape(-1)[:B]


# ---------------- pure-JAX reference (mirrors the PyTorch forward) ----------------
def _ref_forward(emb1, emb2, params):
    shared = list(params.get("shared", []))
    layers1 = list(params["layers1"])
    layers2 = list(params["layers2"])
    n_total = len(shared) + len(layers1)

    def apply(x, layers, start):
        for j, (W, b) in enumerate(layers):
            x = x @ W + b
            if start + j < n_total - 1:
                x = jnp.maximum(x, 0.0)
        return x

    e1 = apply(emb1, shared, 0)
    e2 = apply(emb2, shared, 0)
    e11 = apply(e1, layers1, len(shared))
    e21 = apply(e2, layers1, len(shared))
    e12 = apply(e1, layers2, len(shared))
    e22 = apply(e2, layers2, len(shared))
    score = (jnp.sum(e11 * e21, -1) + jnp.sum(e12 * e22, -1)
             + jnp.sum(e11 * e22, -1) - jnp.sum(e12 * e21, -1))
    return jnp.log(jax.nn.sigmoid(score) + 1e-20)


def _init_linear(key, fan_in, fan_out):
    # mimics nn.Linear default init: U(-1/sqrt(fan_in), 1/sqrt(fan_in))
    kw, kb = jax.random.split(key)
    bound = 1.0 / float(np.sqrt(fan_in))
    W = jax.random.uniform(kw, (fan_in, fan_out), jnp.float32, -bound, bound)
    b = jax.random.uniform(kb, (1, fan_out), jnp.float32, -bound, bound)
    return W, b


if __name__ == "__main__":
    INPUT_DIM, HIDDEN_DIM, OUTPUT_DIM, BATCH = 32, 128, 32, 8

    key = jax.random.PRNGKey(0)
    keys = jax.random.split(key, 10)

    params = {
        "shared": [],  # num_shared_layers = 0 (module default)
        "layers1": [
            _init_linear(keys[0], INPUT_DIM, HIDDEN_DIM),
            _init_linear(keys[1], HIDDEN_DIM, HIDDEN_DIM),
            _init_linear(keys[2], HIDDEN_DIM, OUTPUT_DIM),
        ],
        "layers2": [
            _init_linear(keys[3], INPUT_DIM, HIDDEN_DIM),
            _init_linear(keys[4], HIDDEN_DIM, HIDDEN_DIM),
            _init_linear(keys[5], HIDDEN_DIM, OUTPUT_DIM),
        ],
    }

    emb1 = jax.random.normal(keys[6], (BATCH, INPUT_DIM), jnp.float32)
    emb2 = jax.random.normal(keys[7], (BATCH, INPUT_DIM), jnp.float32)
    idx1 = jnp.arange(BATCH, dtype=jnp.int32)
    idx2 = jnp.arange(BATCH, dtype=jnp.int32)

    ref = jax.block_until_ready(_ref_forward(emb1, emb2, params))

    # 1) Exact-structure check: f32 MXU operands must match the f32 reference.
    out_f32 = jax.block_until_ready(
        neural_complex_forward(idx1, idx2, emb1, emb2, params,
                               matmul_dtype=jnp.float32))
    np.testing.assert_allclose(np.asarray(out_f32), np.asarray(ref),
                               rtol=1e-3, atol=1e-3)

    # 2) Default fast path: bf16 MXU operands with f32 accumulation.
    out = jax.block_until_ready(
        neural_complex_forward(idx1, idx2, emb1, emb2, params))
    np.testing.assert_allclose(np.asarray(out), np.asarray(ref),
                               rtol=1e-1, atol=1e-1)
    assert out.shape == (BATCH,) and bool(jnp.all(jnp.isfinite(out)))

    # 3) Multi-tile path (B > 128, ragged last tile), exact f32 numerics.
    B2 = 384
    emb1b = jax.random.normal(keys[8], (B2, INPUT_DIM), jnp.float32)
    emb2b = jax.random.normal(keys[9], (B2, INPUT_DIM), jnp.float32)
    idx = jnp.arange(B2, dtype=jnp.int32)
    out_b = jax.block_until_ready(
        neural_complex_forward(idx, idx, emb1b, emb2b, params,
                               matmul_dtype=jnp.float32))
    ref_b = jax.block_until_ready(_ref_forward(emb1b, emb2b, params))
    np.testing.assert_allclose(np.asarray(out_b), np.asarray(ref_b),
                               rtol=1e-3, atol=1e-3)
    assert out_b.shape == (B2,) and bool(jnp.all(jnp.isfinite(out_b)))

    print("KERNEL_OK")
</pallas_src>

<mosaic_0001>
module attributes {stable_mosaic.version = 11 : i64} {
  func.func @kernel(%arg0: i32, %arg1: memref<8x32xf32, #tpu.memory_space<vmem>>, %arg2: memref<8x32xf32, #tpu.memory_space<vmem>>, %arg3: memref<32x256xf32, #tpu.memory_space<vmem>>, %arg4: memref<1x256xf32, #tpu.memory_space<vmem>>, %arg5: memref<128x128xf32, #tpu.memory_space<vmem>>, %arg6: memref<1x128xf32, #tpu.memory_space<vmem>>, %arg7: memref<128x32xf32, #tpu.memory_space<vmem>>, %arg8: memref<1x32xf32, #tpu.memory_space<vmem>>, %arg9: memref<128x128xf32, #tpu.memory_space<vmem>>, %arg10: memref<1x128xf32, #tpu.memory_space<vmem>>, %arg11: memref<128x32xf32, #tpu.memory_space<vmem>>, %arg12: memref<1x32xf32, #tpu.memory_space<vmem>>, %arg13: memref<1x1x8xf32, #tpu.memory_space<vmem>>) attributes {dimension_semantics = [#tpu.dimension_semantics<parallel>], iteration_bounds = array<i64: 1>, scalar_prefetch = 0 : i64, scratch_operands = 0 : i64, tpu.core_type = #tpu.core_type<tc>, window_params = [{transform_indices = @transform_0, window_bounds = array<i64: 8, 32>}, {transform_indices = @transform_1, window_bounds = array<i64: 8, 32>}, {pipeline_mode = #tpu.pipeline_mode<synchronous>, transform_indices = @transform_2, window_bounds = array<i64: 32, 256>}, {pipeline_mode = #tpu.pipeline_mode<synchronous>, transform_indices = @transform_3, window_bounds = array<i64: 1, 256>}, {pipeline_mode = #tpu.pipeline_mode<synchronous>, transform_indices = @transform_4, window_bounds = array<i64: 128, 128>}, {pipeline_mode = #tpu.pipeline_mode<synchronous>, transform_indices = @transform_5, window_bounds = array<i64: 1, 128>}, {pipeline_mode = #tpu.pipeline_mode<synchronous>, transform_indices = @transform_6, window_bounds = array<i64: 128, 32>}, {pipeline_mode = #tpu.pipeline_mode<synchronous>, transform_indices = @transform_7, window_bounds = array<i64: 1, 32>}, {pipeline_mode = #tpu.pipeline_mode<synchronous>, transform_indices = @transform_8, window_bounds = array<i64: 128, 128>}, {pipeline_mode = #tpu.pipeline_mode<synchronous>, transform_indices = @transform_9, window_bounds = array<i64: 1, 128>}, {pipeline_mode = #tpu.pipeline_mode<synchronous>, transform_indices = @transform_10, window_bounds = array<i64: 128, 32>}, {pipeline_mode = #tpu.pipeline_mode<synchronous>, transform_indices = @transform_11, window_bounds = array<i64: 1, 32>}, {transform_indices = @transform_12, window_bounds = array<i64: 1, 1, 8>}]} {
    %c0 = arith.constant 0 : index
    %c0_0 = arith.constant 0 : index
    %0 = vector.load %arg1[%c0, %c0_0] : memref<8x32xf32, #tpu.memory_space<vmem>>, vector<8x32xf32>
    %c0_1 = arith.constant 0 : index
    %c0_2 = arith.constant 0 : index
    %1 = vector.load %arg2[%c0_1, %c0_2] : memref<8x32xf32, #tpu.memory_space<vmem>>, vector<8x32xf32>
    %2 = tpu.concatenate %0, %1 in 0 : vector<8x32xf32>, vector<8x32xf32> -> vector<16x32xf32>
    %c0_3 = arith.constant 0 : index
    %c0_4 = arith.constant 0 : index
    %3 = vector.load %arg3[%c0_3, %c0_4] : memref<32x256xf32, #tpu.memory_space<vmem>>, vector<32x256xf32>
    %c0_5 = arith.constant 0 : index
    %c0_6 = arith.constant 0 : index
    %4 = vector.load %arg4[%c0_5, %c0_6] : memref<1x256xf32, #tpu.memory_space<vmem>>, vector<1x256xf32>
    %cst = arith.constant dense<0.000000e+00> : vector<16x256xf32>
    %5 = tpu.matmul %2, %3, %cst {dimension_numbers = #tpu.dot_dimension_numbers<[1], [0], [0], [1], [0, 0, 1, 1], [], []>} : vector<16x32xf32>, vector<32x256xf32>, vector<16x256xf32> -> vector<16x256xf32>
    %6 = vector.broadcast %4 : vector<1x256xf32> to vector<16x256xf32>
    %7 = arith.addf %5, %6 : vector<16x256xf32>
    %cst_7 = arith.constant 0.000000e+00 : f32
    %8 = vector.broadcast %cst_7 : f32 to vector<16x256xf32>
    %9 = arith.maximumf %7, %8 : vector<16x256xf32>
    %10 = vector.extract_strided_slice %9 {offsets = [0, 0], sizes = [16, 128], strides = [1, 1]} : vector<16x256xf32> to vector<16x128xf32>
    %11 = vector.extract_strided_slice %9 {offsets = [0, 128], sizes = [16, 128], strides = [1, 1]} : vector<16x256xf32> to vector<16x128xf32>
    %c0_8 = arith.constant 0 : index
    %c0_9 = arith.constant 0 : index
    %12 = vector.load %arg5[%c0_8, %c0_9] : memref<128x128xf32, #tpu.memory_space<vmem>>, vector<128x128xf32>
    %c0_10 = arith.constant 0 : index
    %c0_11 = arith.constant 0 : index
    %13 = vector.load %arg6[%c0_10, %c0_11] : memref<1x128xf32, #tpu.memory_space<vmem>>, vector<1x128xf32>
    %cst_12 = arith.constant dense<0.000000e+00> : vector<16x128xf32>
    %14 = tpu.matmul %10, %12, %cst_12 {dimension_numbers = #tpu.dot_dimension_numbers<[1], [0], [0], [1], [0, 0, 1, 1], [], []>} : vector<16x128xf32>, vector<128x128xf32>, vector<16x128xf32> -> vector<16x128xf32>
    %15 = vector.broadcast %13 : vector<1x128xf32> to vector<16x128xf32>
    %16 = arith.addf %14, %15 : vector<16x128xf32>
    %cst_13 = arith.constant 0.000000e+00 : f32
    %17 = vector.broadcast %cst_13 : f32 to vector<16x128xf32>
    %18 = arith.maximumf %16, %17 : vector<16x128xf32>
    %c0_14 = arith.constant 0 : index
    %c0_15 = arith.constant 0 : index
    %19 = vector.load %arg7[%c0_14, %c0_15] : memref<128x32xf32, #tpu.memory_space<vmem>>, vector<128x32xf32>
    %c0_16 = arith.constant 0 : index
    %c0_17 = arith.constant 0 : index
    %20 = vector.load %arg8[%c0_16, %c0_17] : memref<1x32xf32, #tpu.memory_space<vmem>>, vector<1x32xf32>
    %cst_18 = arith.constant dense<0.000000e+00> : vector<16x32xf32>
    %21 = tpu.matmul %18, %19, %cst_18 {dimension_numbers = #tpu.dot_dimension_numbers<[1], [0], [0], [1], [0, 0, 1, 1], [], []>} : vector<16x128xf32>, vector<128x32xf32>, vector<16x32xf32> -> vector<16x32xf32>
    %22 = vector.broadcast %20 : vector<1x32xf32> to vector<16x32xf32>
    %23 = arith.addf %21, %22 : vector<16x32xf32>
    %c0_19 = arith.constant 0 : index
    %c0_20 = arith.constant 0 : index
    %24 = vector.load %arg9[%c0_19, %c0_20] : memref<128x128xf32, #tpu.memory_space<vmem>>, vector<128x128xf32>
    %c0_21 = arith.constant 0 : index
    %c0_22 = arith.constant 0 : index
    %25 = vector.load %arg10[%c0_21, %c0_22] : memref<1x128xf32, #tpu.memory_space<vmem>>, vector<1x128xf32>
    %cst_23 = arith.constant dense<0.000000e+00> : vector<16x128xf32>
    %26 = tpu.matmul %11, %24, %cst_23 {dimension_numbers = #tpu.dot_dimension_numbers<[1], [0], [0], [1], [0, 0, 1, 1], [], []>} : vector<16x128xf32>, vector<128x128xf32>, vector<16x128xf32> -> vector<16x128xf32>
    %27 = vector.broadcast %25 : vector<1x128xf32> to vector<16x128xf32>
    %28 = arith.addf %26, %27 : vector<16x128xf32>
    %cst_24 = arith.constant 0.000000e+00 : f32
    %29 = vector.broadcast %cst_24 : f32 to vector<16x128xf32>
    %30 = arith.maximumf %28, %29 : vector<16x128xf32>
    %c0_25 = arith.constant 0 : index
    %c0_26 = arith.constant 0 : index
    %31 = vector.load %arg11[%c0_25, %c0_26] : memref<128x32xf32, #tpu.memory_space<vmem>>, vector<128x32xf32>
    %c0_27 = arith.constant 0 : index
    %c0_28 = arith.constant 0 : index
    %32 = vector.load %arg12[%c0_27, %c0_28] : memref<1x32xf32, #tpu.memory_space<vmem>>, vector<1x32xf32>
    %cst_29 = arith.constant dense<0.000000e+00> : vector<16x32xf32>
    %33 = tpu.matmul %30, %31, %cst_29 {dimension_numbers = #tpu.dot_dimension_numbers<[1], [0], [0], [1], [0, 0, 1, 1], [], []>} : vector<16x128xf32>, vector<128x32xf32>, vector<16x32xf32> -> vector<16x32xf32>
    %34 = vector.broadcast %32 : vector<1x32xf32> to vector<16x32xf32>
    %35 = arith.addf %33, %34 : vector<16x32xf32>
    %36 = vector.extract_strided_slice %23 {offsets = [0, 0], sizes = [8, 32], strides = [1, 1]} : vector<16x32xf32> to vector<8x32xf32>
    %37 = vector.extract_strided_slice %23 {offsets = [8, 0], sizes = [8, 32], strides = [1, 1]} : vector<16x32xf32> to vector<8x32xf32>
    %38 = vector.extract_strided_slice %35 {offsets = [0, 0], sizes = [8, 32], strides = [1, 1]} : vector<16x32xf32> to vector<8x32xf32>
    %39 = vector.extract_strided_slice %35 {offsets = [8, 0], sizes = [8, 32], strides = [1, 1]} : vector<16x32xf32> to vector<8x32xf32>
    %40 = arith.addf %37, %39 : vector<8x32xf32>
    %41 = arith.mulf %36, %40 : vector<8x32xf32>
    %42 = arith.subf %39, %37 : vector<8x32xf32>
    %43 = arith.mulf %38, %42 : vector<8x32xf32>
    %44 = arith.addf %41, %43 : vector<8x32xf32>
    %cst_30 = arith.constant 1.000000e+00 : f32
    %45 = vector.broadcast %cst_30 : f32 to vector<1x32xf32>
    %cst_31 = arith.constant dense<0.000000e+00> : vector<1x8xf32>
    %46 = tpu.matmul %45, %44, %cst_31 {dimension_numbers = #tpu.dot_dimension_numbers<[1], [1], [0], [0], [0, 0, 1, 0], [], []>} : vector<1x32xf32>, vector<8x32xf32>, vector<1x8xf32> -> vector<1x8xf32>
    %47 = math.absf %46 : vector<1x8xf32>
    %cst_32 = arith.constant 0.000000e+00 : f32
    %48 = vector.broadcast %cst_32 : f32 to vector<1x8xf32>
    %49 = arith.subf %48, %47 : vector<1x8xf32>
    %50 = math.exp %49 : vector<1x8xf32>
    %cst_33 = arith.constant 0.000000e+00 : f32
    %51 = vector.broadcast %cst_33 : f32 to vector<1x8xf32>
    %52 = arith.cmpf oge, %46, %51 : vector<1x8xf32>
    %cst_34 = arith.constant 1.000000e+00 : f32
    %53 = vector.broadcast %cst_34 : f32 to vector<1x8xf32>
    %54 = arith.addf %53, %50 : vector<1x8xf32>
    %cst_35 = arith.constant 1.000000e+00 : f32
    %55 = vector.broadcast %cst_35 : f32 to vector<1x8xf32>
    %56 = arith.divf %55, %54 : vector<1x8xf32>
    %cst_36 = arith.constant 1.000000e+00 : f32
    %57 = vector.broadcast %cst_36 : f32 to vector<1x8xf32>
    %58 = arith.addf %57, %50 : vector<1x8xf32>
    %59 = arith.divf %50, %58 : vector<1x8xf32>
    %60 = arith.select %52, %56, %59 : vector<1x8xi1>, vector<1x8xf32>
    %cst_37 = arith.constant 9.99999968E-21 : f32
    %61 = vector.broadcast %cst_37 : f32 to vector<1x8xf32>
    %62 = arith.addf %60, %61 : vector<1x8xf32>
    %63 = math.log %62 : vector<1x8xf32>
    %c0_38 = arith.constant 0 : index
    %c0_39 = arith.constant 0 : index
    %c0_40 = arith.constant 0 : index
    %64 = vector.load %arg13[%c0_38, %c0_39, %c0_40] : memref<1x1x8xf32, #tpu.memory_space<vmem>>, vector<1x1x8xf32>
    %65 = vector.shape_cast %64 : vector<1x1x8xf32> to vector<1x8xf32>
    %66 = vector.shape_cast %63 : vector<1x8xf32> to vector<1x1x8xf32>
    tpu.vector_store %arg13[%c0_38, %c0_39, %c0_40], %66 {strides = array<i32>} : memref<1x1x8xf32, #tpu.memory_space<vmem>>, vector<1x1x8xf32>,
    return
  }
  func.func @transform_0(%arg0: i32) -> (i32, i32) {
    %c0_i32 = arith.constant 0 : i32
    %c0_i32_0 = arith.constant 0 : i32
    return %arg0, %c0_i32 : i32, i32
  }
  func.func @transform_1(%arg0: i32) -> (i32, i32) {
    %c0_i32 = arith.constant 0 : i32
    %c0_i32_0 = arith.constant 0 : i32
    return %arg0, %c0_i32 : i32, i32
  }
  func.func @transform_2(%arg0: i32) -> (i32, i32) {
    %c0_i32 = arith.constant 0 : i32
    %c0_i32_0 = arith.constant 0 : i32
    %c0_i32_1 = arith.constant 0 : i32
    return %c0_i32, %c0_i32_0 : i32, i32
  }
  func.func @transform_3(%arg0: i32) -> (i32, i32) {
    %c0_i32 = arith.constant 0 : i32
    %c0_i32_0 = arith.constant 0 : i32
    %c0_i32_1 = arith.constant 0 : i32
    return %c0_i32, %c0_i32_0 : i32, i32
  }
  func.func @transform_4(%arg0: i32) -> (i32, i32) {
    %c0_i32 = arith.constant 0 : i32
    %c0_i32_0 = arith.constant 0 : i32
    %c0_i32_1 = arith.constant 0 : i32
    return %c0_i32, %c0_i32_0 : i32, i32
  }
  func.func @transform_5(%arg0: i32) -> (i32, i32) {
    %c0_i32 = arith.constant 0 : i32
    %c0_i32_0 = arith.constant 0 : i32
    %c0_i32_1 = arith.constant 0 : i32
    return %c0_i32, %c0_i32_0 : i32, i32
  }
  func.func @transform_6(%arg0: i32) -> (i32, i32) {
    %c0_i32 = arith.constant 0 : i32
    %c0_i32_0 = arith.constant 0 : i32
    %c0_i32_1 = arith.constant 0 : i32
    return %c0_i32, %c0_i32_0 : i32, i32
  }
  func.func @transform_7(%arg0: i32) -> (i32, i32) {
    %c0_i32 = arith.constant 0 : i32
    %c0_i32_0 = arith.constant 0 : i32
    %c0_i32_1 = arith.constant 0 : i32
    return %c0_i32, %c0_i32_0 : i32, i32
  }
  func.func @transform_8(%arg0: i32) -> (i32, i32) {
    %c0_i32 = arith.constant 0 : i32
    %c0_i32_0 = arith.constant 0 : i32
    %c0_i32_1 = arith.constant 0 : i32
    return %c0_i32, %c0_i32_0 : i32, i32
  }
  func.func @transform_9(%arg0: i32) -> (i32, i32) {
    %c0_i32 = arith.constant 0 : i32
    %c0_i32_0 = arith.constant 0 : i32
    %c0_i32_1 = arith.constant 0 : i32
    return %c0_i32, %c0_i32_0 : i32, i32
  }
  func.func @transform_10(%arg0: i32) -> (i32, i32) {
    %c0_i32 = arith.constant 0 : i32
    %c0_i32_0 = arith.constant 0 : i32
    %c0_i32_1 = arith.constant 0 : i32
    return %c0_i32, %c0_i32_0 : i32, i32
  }
  func.func @transform_11(%arg0: i32) -> (i32, i32) {
    %c0_i32 = arith.constant 0 : i32
    %c0_i32_0 = arith.constant 0 : i32
    %c0_i32_1 = arith.constant 0 : i32
    return %c0_i32, %c0_i32_0 : i32, i32
  }
  func.func @transform_12(%arg0: i32) -> (i32, i32, i32) {
    %c0_i32 = arith.constant 0 : i32
    %c0_i32_0 = arith.constant 0 : i32
    %c0_i32_1 = arith.constant 0 : i32
    return %arg0, %c0_i32, %c0_i32_0 : i32, i32, i32
  }
}

</mosaic_0001>

<llo_original>
// kernel: tpu_custom_call.1
$region0: #{tpu_custom_call.1}
  #allocation0 [shape = 'u32[]', space=smem, size = 0x4, offset = 0x4, fixed_abs, tag = 'smem constant byte address 0x4 - core index']
  #allocation1 [shape = 'u32[144,128]{1,0:T(1,128)}', space=vmem, size = 0x12000, scoped, tag = 'internal scratch']
  %s0 = inlined_call_operand.hbm [shape: f32[8,32], index: 0, kind: input, shape index: {}]
  %s1 = inlined_call_operand.hbm [shape: f32[8,32], index: 1, kind: input, shape index: {}]
  %s2 = inlined_call_operand.vmem [shape: f32[32,256], index: 2, kind: input, shape index: {}]
  %s3 = inlined_call_operand.vmem [shape: f32[1,256], index: 3, kind: input, shape index: {}]
  %s4 = inlined_call_operand.vmem [shape: f32[128,128], index: 4, kind: input, shape index: {}]
  %s5 = inlined_call_operand.hbm [shape: f32[1,128], index: 5, kind: input, shape index: {}]
  %s6 = inlined_call_operand.vmem [shape: f32[128,32], index: 6, kind: input, shape index: {}]
  %s7 = inlined_call_operand.hbm [shape: f32[1,32], index: 7, kind: input, shape index: {}]
  %s8 = inlined_call_operand.vmem [shape: f32[128,128], index: 8, kind: input, shape index: {}]
  %s9 = inlined_call_operand.hbm [shape: f32[1,128], index: 9, kind: input, shape index: {}]
  %s10 = inlined_call_operand.vmem [shape: f32[128,32], index: 10, kind: input, shape index: {}]
  %s11 = inlined_call_operand.vmem [shape: f32[1,32], index: 11, kind: input, shape index: {}]
  %s12 = inlined_call_operand.hbm [shape: f32[1,1,8], index: 12, kind: output, shape index: {}]
  %s13 = sld [smem:[#allocation0]]
  $region78: #{tpu_custom_call.1} parent=0
    _
  %s15 = ssub.s32 1, %s13
  %s16 = scalar_select 0, %s15, %s13
  $region1: #{tpu_custom_call.1} parent=0
    #allocation2 [shape = 'u8[4096]{0}', space=vmem, size = 0x1000, scoped, tag = 'input window, operand 0, single buffered']
    #allocation3 [shape = 's32[1]{0}', space=sflag, size = 0x4, scoped, tag = 'scoped memory for tpu_custom_call.1']
    #allocation4 [shape = 's32[1]{0}', space=sflag, size = 0x4, scoped, tag = 'scoped memory for tpu_custom_call.1']
    #allocation5 [shape = 'u8[4096]{0}', space=vmem, size = 0x1000, scoped, tag = 'input window, operand 1, single buffered']
    #allocation6 [shape = 's32[1]{0}', space=sflag, size = 0x4, scoped, tag = 'scoped memory for tpu_custom_call.1']
    #allocation7 [shape = 'u8[512]{0}', space=vmem, size = 0x400, scoped, tag = 'input window, operand 5, single buffered']
    #allocation8 [shape = 'u8[512]{0}', space=vmem, size = 0x400, scoped, tag = 'input window, operand 7, single buffered']
    #allocation9 [shape = 's32[1]{0}', space=sflag, size = 0x4, scoped, tag = 'scoped memory for tpu_custom_call.1']
    #allocation10 [shape = 'u8[512]{0}', space=vmem, size = 0x400, scoped, tag = 'input window, operand 9, single buffered']
    #allocation11 [shape = 'u8[512]{0}', space=vmem, size = 0x400, scoped, tag = 'output window, operand 0, single buffered']
    %17 = vsyncpa [#allocation3], 0
    %18 = vsyncpa [#allocation6], 0
    %19 = vsyncpa [#allocation9], 0
    %20 = vsyncpa [#allocation4], 0
    // Predicated region
    $region2: #{tpu_custom_call.1} parent=1 // pred_check
      _
    $region3: #{tpu_custom_call.1} parent=1 // pred_check_branch
      %22 = sbr.rel (0) target = $region5
    $region4: #{tpu_custom_call.1} parent=1 // pred_region
      %s24 = ssub.s32 128, 128
      %25 = vsyncadd [#allocation3], %s24
      %s27 = sshll.u32 [#allocation2], 4
      %s28 = int_to_ptr.vmem [resolvable:$true] %s27
      %30 = dma.hbm_to_vmem [thread:$0]  %s0, 128, %s28, [#allocation3]
    $region5: #{tpu_custom_call.1} parent=1 // pred_fallthru
      _
    // Predicated region
    $region6: #{tpu_custom_call.1} parent=1 // pred_check
      _
    $region7: #{tpu_custom_call.1} parent=1 // pred_check_branch
      %32 = sbr.rel (0) target = $region9
    $region8: #{tpu_custom_call.1} parent=1 // pred_region
      %s34 = ssub.s32 128, 128
      %35 = vsyncadd [#allocation6], %s34
      %s37 = sshll.u32 [#allocation5], 4
      %s38 = int_to_ptr.vmem [resolvable:$true] %s37
      %40 = dma.hbm_to_vmem [thread:$0]  %s1, 128, %s38, [#allocation6]
    $region9: #{tpu_custom_call.1} parent=1 // pred_fallthru
      _
    // Predicated region
    $region10: #{tpu_custom_call.1} parent=1 // pred_check
      _
    $region11: #{tpu_custom_call.1} parent=1 // pred_check_branch
      %42 = sbr.rel (0) target = $region13
    $region12: #{tpu_custom_call.1} parent=1 // pred_region
      _
    $region13: #{tpu_custom_call.1} parent=1 // pred_fallthru
      _
    // Predicated region
    $region14: #{tpu_custom_call.1} parent=1 // pred_check
      _
    $region15: #{tpu_custom_call.1} parent=1 // pred_check_branch
      %44 = sbr.rel (0) target = $region17
    $region16: #{tpu_custom_call.1} parent=1 // pred_region
      _
    $region17: #{tpu_custom_call.1} parent=1 // pred_fallthru
      _
    // Predicated region
    $region18: #{tpu_custom_call.1} parent=1 // pred_check
      _
    $region19: #{tpu_custom_call.1} parent=1 // pred_check_branch
      %46 = sbr.rel (0) target = $region21
    $region20: #{tpu_custom_call.1} parent=1 // pred_region
      _
    $region21: #{tpu_custom_call.1} parent=1 // pred_fallthru
      _
    // Predicated region
    $region22: #{tpu_custom_call.1} parent=1 // pred_check
      _
    $region23: #{tpu_custom_call.1} parent=1 // pred_check_branch
      %48 = sbr.rel (0) target = $region25
    $region24: #{tpu_custom_call.1} parent=1 // pred_region
      %s50 = ssub.s32 16, 16
      %51 = vsyncadd [#allocation6], %s50
      %s53 = sshll.u32 [#allocation7], 4
      %s54 = int_to_ptr.vmem [resolvable:$true] %s53
      %56 = dma.hbm_to_vmem [thread:$0]  %s5, 16, %s54, [#allocation6]
    $region25: #{tpu_custom_call.1} parent=1 // pred_fallthru
      _
    // Predicated region
    $region26: #{tpu_custom_call.1} parent=1 // pred_check
      _
    $region27: #{tpu_custom_call.1} parent=1 // pred_check_branch
      %58 = sbr.rel (0) target = $region29
    $region28: #{tpu_custom_call.1} parent=1 // pred_region
      _
    $region29: #{tpu_custom_call.1} parent=1 // pred_fallthru
      _
    // Predicated region
    $region30: #{tpu_custom_call.1} parent=1 // pred_check
      _
    $region31: #{tpu_custom_call.1} parent=1 // pred_check_branch
      %60 = sbr.rel (0) target = $region33
    $region32: #{tpu_custom_call.1} parent=1 // pred_region
      %s62 = ssub.s32 16, 16
      %63 = vsyncadd [#allocation9], %s62
      %s65 = sshll.u32 [#allocation8], 4
      %s66 = int_to_ptr.vmem [resolvable:$true] %s65
      %68 = dma.hbm_to_vmem [thread:$0]  %s7, 16, %s66, [#allocation9]
    $region33: #{tpu_custom_call.1} parent=1 // pred_fallthru
      _
    // Predicated region
    $region34: #{tpu_custom_call.1} parent=1 // pred_check
      _
    $region35: #{tpu_custom_call.1} parent=1 // pred_check_branch
      %70 = sbr.rel (0) target = $region37
    $region36: #{tpu_custom_call.1} parent=1 // pred_region
      _
    $region37: #{tpu_custom_call.1} parent=1 // pred_fallthru
      _
    // Predicated region
    $region38: #{tpu_custom_call.1} parent=1 // pred_check
      _
    $region39: #{tpu_custom_call.1} parent=1 // pred_check_branch
      %72 = sbr.rel (0) target = $region41
    $region40: #{tpu_custom_call.1} parent=1 // pred_region
      %s74 = ssub.s32 16, 16
      %75 = vsyncadd [#allocation9], %s74
      %s77 = sshll.u32 [#allocation10], 4
      %s78 = int_to_ptr.vmem [resolvable:$true] %s77
      %80 = dma.hbm_to_vmem [thread:$0]  %s9, 16, %s78, [#allocation9]
    $region41: #{tpu_custom_call.1} parent=1 // pred_fallthru
      _
    // Predicated region
    $region42: #{tpu_custom_call.1} parent=1 // pred_check
      _
    $region43: #{tpu_custom_call.1} parent=1 // pred_check_branch
      %82 = sbr.rel (0) target = $region45
    $region44: #{tpu_custom_call.1} parent=1 // pred_region
      _
    $region45: #{tpu_custom_call.1} parent=1 // pred_fallthru
      _
    // Predicated region
    $region46: #{tpu_custom_call.1} parent=1 // pred_check
      _
    $region47: #{tpu_custom_call.1} parent=1 // pred_check_branch
      %84 = sbr.rel (0) target = $region49
    $region48: #{tpu_custom_call.1} parent=1 // pred_region
      _
    $region49: #{tpu_custom_call.1} parent=1 // pred_fallthru
      _
    // Predicated region
    $region50: #{tpu_custom_call.1} parent=1 // pred_check
      _
    $region51: #{tpu_custom_call.1} parent=1 // pred_check_branch
      %86 = sbr.rel (0) target = $region53
    $region52: #{tpu_custom_call.1} parent=1 // pred_region
      %87 = dma.done [#allocation3], 128
    $region53: #{tpu_custom_call.1} parent=1 // pred_fallthru
      _
    // Predicated region
    $region54: #{tpu_custom_call.1} parent=1 // pred_check
      _
    $region55: #{tpu_custom_call.1} parent=1 // pred_check_branch
      %89 = sbr.rel (0) target = $region57
    $region56: #{tpu_custom_call.1} parent=1 // pred_region
      %90 = dma.done [#allocation6], 128
    $region57: #{tpu_custom_call.1} parent=1 // pred_fallthru
      _
    // Predicated region
    $region58: #{tpu_custom_call.1} parent=1 // pred_check
      _
    $region59: #{tpu_custom_call.1} parent=1 // pred_check_branch
      %92 = sbr.rel (0) target = $region61
    $region60: #{tpu_custom_call.1} parent=1 // pred_region
      %93 = dma.done [#allocation6], 16
    $region61: #{tpu_custom_call.1} parent=1 // pred_fallthru
      _
    // Predicated region
    $region62: #{tpu_custom_call.1} parent=1 // pred_check
      _
    $region63: #{tpu_custom_call.1} parent=1 // pred_check_branch
      %95 = sbr.rel (0) target = $region65
    $region64: #{tpu_custom_call.1} parent=1 // pred_region
      %96 = dma.done [#allocation9], 16
    $region65: #{tpu_custom_call.1} parent=1 // pred_fallthru
      _
    // Predicated region
    $region66: #{tpu_custom_call.1} parent=1 // pred_check
      _
    $region67: #{tpu_custom_call.1} parent=1 // pred_check_branch
      %98 = sbr.rel (0) target = $region69
    $region68: #{tpu_custom_call.1} parent=1 // pred_region
      %99 = dma.done [#allocation9], 16
    $region69: #{tpu_custom_call.1} parent=1 // pred_fallthru
      _
    %v100 = vld [vmem:[#allocation2] sm:$0xff]
    %v101 = vld [vmem:[#allocation5] sm:$0xff]
    %v102 = vld [vmem:[%s2] sm:$0xff]
    %v103 = vld [vmem:[%s2 + $0x8] sm:$0xff]
    %v104 = vld [vmem:[%s2 + $0x10] sm:$0xff]
    %v105 = vld [vmem:[%s2 + $0x18] sm:$0xff]
    %v106 = vld [vmem:[%s2 + $0x20] sm:$0xff]
    %v107 = vld [vmem:[%s2 + $0x28] sm:$0xff]
    %v108 = vld [vmem:[%s2 + $0x30] sm:$0xff]
    %v109 = vld [vmem:[%s2 + $0x38] sm:$0xff]
    %v110 = vld [vmem:[%s3] sm:$0x3]
    %v112 = vlaneseq
    %v113 = vshrl.u32 %v112, 7
    %v114 = vsub.s32 0, %v113
    %v115 = vrot.slane %v110, %v114
    %v116 = vlaneseq
    %v117 = vshrl.u32 %v116, 7
    %v118 = vsub.s32 1, %v117
    %v119 = vrot.slane %v110, %v118
    %vm122 = vcmask 261120
    %v124 = vsel %vm122, %v100, 0
    %v127 = vsel %vm122, %v101, 0
    %129 = vmatprep.subr.mxu0 %v103
    %130 = vmatpush1.msra.mxu0 %v102
    %131 = vmatprep.subr.mxu0 %v105
    %132 = vmatpush1.msra.mxu0 %v104
    %133 = vmatprep.subr.mxu0 %v107
    %134 = vmatpush1.msra.mxu0 %v106
    %135 = vmatprep.subr.mxu0 %v109
    %136 = vmatpush1.msra.mxu0 %v108
    %137 = vmatprep.subr.mxu0 0.0
    %138 = vmatpush1.msra.mxu0 0.0
    %139 = vmatprep.subr.mxu0 0.0
    %140 = vmatpush1.msra.mxu0 0.0
    %141 = vmatprep.subr.mxu0 0.0
    %142 = vmatpush1.msra.mxu0 0.0
    %143 = vmatprep.subr.mxu0 0.0
    %144 = vmatpush1.msra.mxu0 0.0
    %145 = vmatprep.subr.mxu0 0.0
    %146 = vmatpush1.msra.mxu0 0.0
    %147 = vmatprep.subr.mxu0 0.0
    %148 = vmatpush1.msra.mxu0 0.0
    %149 = vmatprep.subr.mxu0 0.0
    %150 = vmatpush1.msra.mxu0 0.0
    %151 = vmatprep.subr.mxu0 0.0
    %152 = vmatpush1.msra.mxu0 0.0
    %153 = vmatprep.subr.mxu0 0.0
    %154 = vmatpush1.msra.mxu0 0.0
    %155 = vmatprep.subr.mxu0 0.0
    %156 = vmatpush1.msra.mxu0 0.0
    %157 = vmatprep.subr.mxu0 0.0
    %158 = vmatpush1.msra.mxu0 0.0
    %159 = vmatprep.subr.mxu0 0.0
    %160 = vmatpush1.msra.mxu0 0.0
    %161 = vmatprep.subr.mxu0 0.0
    %162 = vmatpush1.msra.mxu0 0.0
    %163 = vmatprep.subr.mxu0 0.0
    %164 = vmatpush1.msra.mxu0 0.0
    %165 = vmatprep.subr.mxu0 0.0
    %166 = vmatpush1.msra.mxu0 0.0
    %167 = vmatprep.subr.mxu0 0.0
    %168 = vmatpush1.msra.mxu0 0.0
    %169 = vmatprep.subr.mxu0 0.0
    %170 = vmatpush1.msra.mxu0 0.0
    %171 = vmatprep.subr.mxu0 0.0
    %172 = vmatpush1.msra.mxu0 0.0
    %173 = vmatprep.subr.mxu0 0.0
    %174 = vmatpush1.msra.mxu0 0.0
    %175 = vmatprep.subr.mxu0 0.0
    %176 = vmatpush1.msra.mxu0 0.0
    %177 = vmatprep.subr.mxu0 0.0
    %178 = vmatpush1.msra.mxu0 0.0
    %179 = vmatprep.subr.mxu0 0.0
    %180 = vmatpush1.msra.mxu0 0.0
    %181 = vmatprep.subr.mxu0 0.0
    %182 = vmatpush1.msra.mxu0 0.0
    %183 = vmatprep.subr.mxu0 0.0
    %184 = vmatpush1.msra.mxu0 0.0
    %185 = vmatprep.subr.mxu0 0.0
    %186 = vmatpush1.msra.mxu0 0.0
    %187 = vmatprep.subr.mxu0 0.0
    %188 = vmatpush1.msra.mxu0 0.0
    %189 = vmatprep.subr.mxu0 0.0
    %190 = vmatpush1.msra.mxu0 0.0
    %191 = vmatprep.subr.mxu0 0.0
    %192 = vmatpush1.msra.mxu0 0.0
    %193 = vmatprep.mubr.f32.mxu0 0.0
    %194 = vmatmul.mubr.f32.gmra.mrb[0].mxu0 %v124
    %v195 = vpop.f32.mrb[0].mxu0
    %v196 = vadd.f32 %v115, %v195
    %v197 = vpop.f32.mrb[0].mxu0
    %v198 = vadd.f32 %v119, %v197
    %199 = vmatprep.mubr.f32.mxu0 0.0
    %200 = vmatmul.mubr.f32.gmra.mrb[0].mxu0 %v127
    %v201 = vpop.f32.mrb[0].mxu0
    %v202 = vadd.f32 %v115, %v201
    %v203 = vpop.f32.mrb[0].mxu0
    %v204 = vadd.f32 %v119, %v203
    %205 = vdwg.mxu0
    %v206 = vmax.f32 %v196, 0.0
    %v207 = vmax.f32 %v198, 0.0
    %v208 = vmax.f32 %v202, 0.0
    %v209 = vmax.f32 %v204, 0.0
    %v210 = vld [vmem:[%s4] sm:$0xff]
    %v211 = vld [vmem:[%s4 + $0x8] sm:$0xff]
    %v212 = vld [vmem:[%s4 + $0x10] sm:$0xff]
    %v213 = vld [vmem:[%s4 + $0x18] sm:$0xff]
    %v214 = vld [vmem:[%s4 + $0x20] sm:$0xff]
    %v215 = vld [vmem:[%s4 + $0x28] sm:$0xff]
    %v216 = vld [vmem:[%s4 + $0x30] sm:$0xff]
    %v217 = vld [vmem:[%s4 + $0x38] sm:$0xff]
    %v218 = vld [vmem:[%s4 + $0x40] sm:$0xff]
    %v219 = vld [vmem:[%s4 + $0x48] sm:$0xff]
    %v220 = vld [vmem:[%s4 + $0x50] sm:$0xff]
    %v221 = vld [vmem:[%s4 + $0x58] sm:$0xff]
    %v222 = vld [vmem:[%s4 + $0x60] sm:$0xff]
    %v223 = vld [vmem:[%s4 + $0x68] sm:$0xff]
    %v224 = vld [vmem:[%s4 + $0x70] sm:$0xff]
    %v225 = vld [vmem:[%s4 + $0x78] sm:$0xff]
    %v226 = vld [vmem:[#allocation7] sm:$0x1]
    %v228 = vlaneseq
    %v229 = vshrl.u32 %v228, 7
    %v230 = vsub.s32 0, %v229
    %v231 = vrot.slane %v226, %v230
    %233 = vmatprep.subr.mxu0 0.0
    %234 = vmatpush1.msra.mxu0 %v210
    %235 = vmatprep.subr.mxu0 0.0
    %236 = vmatpush1.msra.mxu0 %v211
    %237 = vmatprep.subr.mxu0 0.0
    %238 = vmatpush1.msra.mxu0 %v212
    %239 = vmatprep.subr.mxu0 0.0
    %240 = vmatpush1.msra.mxu0 %v213
    %241 = vmatprep.subr.mxu0 0.0
    %242 = vmatpush1.msra.mxu0 %v214
    %243 = vmatprep.subr.mxu0 0.0
    %244 = vmatpush1.msra.mxu0 %v215
    %245 = vmatprep.subr.mxu0 0.0
    %246 = vmatpush1.msra.mxu0 %v216
    %247 = vmatprep.subr.mxu0 0.0
    %248 = vmatpush1.msra.mxu0 %v217
    %249 = vmatprep.subr.mxu0 0.0
    %250 = vmatpush1.msra.mxu0 %v218
    %251 = vmatprep.subr.mxu0 0.0
    %252 = vmatpush1.msra.mxu0 %v219
    %253 = vmatprep.subr.mxu0 0.0
    %254 = vmatpush1.msra.mxu0 %v220
    %255 = vmatprep.subr.mxu0 0.0
    %256 = vmatpush1.msra.mxu0 %v221
    %257 = vmatprep.subr.mxu0 0.0
    %258 = vmatpush1.msra.mxu0 %v222
    %259 = vmatprep.subr.mxu0 0.0
    %260 = vmatpush1.msra.mxu0 %v223
    %261 = vmatprep.subr.mxu0 0.0
    %262 = vmatpush1.msra.mxu0 %v224
    %263 = vmatprep.subr.mxu0 0.0
    %264 = vmatpush1.msra.mxu0 %v225
    %265 = vmatprep.subr.mxu0 0.0
    %266 = vmatpush1.msra.mxu0 0.0
    %267 = vmatprep.subr.mxu0 0.0
    %268 = vmatpush1.msra.mxu0 0.0
    %269 = vmatprep.subr.mxu0 0.0
    %270 = vmatpush1.msra.mxu0 0.0
    %271 = vmatprep.subr.mxu0 0.0
    %272 = vmatpush1.msra.mxu0 0.0
    %273 = vmatprep.subr.mxu0 0.0
    %274 = vmatpush1.msra.mxu0 0.0
    %275 = vmatprep.subr.mxu0 0.0
    %276 = vmatpush1.msra.mxu0 0.0
    %277 = vmatprep.subr.mxu0 0.0
    %278 = vmatpush1.msra.mxu0 0.0
    %279 = vmatprep.subr.mxu0 0.0
    %280 = vmatpush1.msra.mxu0 0.0
    %281 = vmatprep.subr.mxu0 0.0
    %282 = vmatpush1.msra.mxu0 0.0
    %283 = vmatprep.subr.mxu0 0.0
    %284 = vmatpush1.msra.mxu0 0.0
    %285 = vmatprep.subr.mxu0 0.0
    %286 = vmatpush1.msra.mxu0 0.0
    %287 = vmatprep.subr.mxu0 0.0
    %288 = vmatpush1.msra.mxu0 0.0
    %289 = vmatprep.subr.mxu0 0.0
    %290 = vmatpush1.msra.mxu0 0.0
    %291 = vmatprep.subr.mxu0 0.0
    %292 = vmatpush1.msra.mxu0 0.0
    %293 = vmatprep.subr.mxu0 0.0
    %294 = vmatpush1.msra.mxu0 0.0
    %295 = vmatprep.subr.mxu0 0.0
    %296 = vmatpush1.msra.mxu0 0.0
    %297 = vmatprep.mubr.f32.mxu0 0.0
    %298 = vmatmul.mubr.f32.gmra.mrb[0].mxu0 %v206
    %v299 = vpop.f32.mrb[0].mxu0
    %v300 = vadd.f32 %v231, %v299
    %v301 = vpop.f32.mrb[0].mxu0
    %302 = vmatprep.mubr.f32.mxu0 0.0
    %303 = vmatmul.mubr.f32.gmra.mrb[0].mxu0 %v208
    %v304 = vpop.f32.mrb[0].mxu0
    %v305 = vadd.f32 %v231, %v304
    %v306 = vpop.f32.mrb[0].mxu0
    %307 = vdwg.mxu0
    %v308 = vmax.f32 %v300, 0.0
    %v309 = vmax.f32 %v305, 0.0
    %v310 = vld [vmem:[%s6] sm:$0xff]
    %v311 = vld [vmem:[%s6 + $0x8] sm:$0xff]
    %v312 = vld [vmem:[%s6 + $0x10] sm:$0xff]
    %v313 = vld [vmem:[%s6 + $0x18] sm:$0xff]
    %v314 = vld [vmem:[%s6 + $0x20] sm:$0xff]
    %v315 = vld [vmem:[%s6 + $0x28] sm:$0xff]
    %v316 = vld [vmem:[%s6 + $0x30] sm:$0xff]
    %v317 = vld [vmem:[%s6 + $0x38] sm:$0xff]
    %v318 = vld [vmem:[%s6 + $0x40] sm:$0xff]
    %v319 = vld [vmem:[%s6 + $0x48] sm:$0xff]
    %v320 = vld [vmem:[%s6 + $0x50] sm:$0xff]
    %v321 = vld [vmem:[%s6 + $0x58] sm:$0xff]
    %v322 = vld [vmem:[%s6 + $0x60] sm:$0xff]
    %v323 = vld [vmem:[%s6 + $0x68] sm:$0xff]
    %v324 = vld [vmem:[%s6 + $0x70] sm:$0xff]
    %v325 = vld [vmem:[%s6 + $0x78] sm:$0xff]
    %v326 = vld [vmem:[#allocation8] sm:$0x1]
    %v328 = vlaneseq
    %v329 = vshrl.u32 %v328, 7
    %v330 = vsub.s32 0, %v329
    %v331 = vrot.slane %v326, %v330
    %333 = vmatprep.subr.mxu0 0.0
    %334 = vmatpush1.msra.mxu0 %v310
    %335 = vmatprep.subr.mxu0 0.0
    %336 = vmatpush1.msra.mxu0 %v311
    %337 = vmatprep.subr.mxu0 0.0
    %338 = vmatpush1.msra.mxu0 %v312
    %339 = vmatprep.subr.mxu0 0.0
    %340 = vmatpush1.msra.mxu0 %v313
    %341 = vmatprep.subr.mxu0 0.0
    %342 = vmatpush1.msra.mxu0 %v314
    %343 = vmatprep.subr.mxu0 0.0
    %344 = vmatpush1.msra.mxu0 %v315
    %345 = vmatprep.subr.mxu0 0.0
    %346 = vmatpush1.msra.mxu0 %v316
    %347 = vmatprep.subr.mxu0 0.0
    %348 = vmatpush1.msra.mxu0 %v317
    %349 = vmatprep.subr.mxu0 0.0
    %350 = vmatpush1.msra.mxu0 %v318
    %351 = vmatprep.subr.mxu0 0.0
    %352 = vmatpush1.msra.mxu0 %v319
    %353 = vmatprep.subr.mxu0 0.0
    %354 = vmatpush1.msra.mxu0 %v320
    %355 = vmatprep.subr.mxu0 0.0
    %356 = vmatpush1.msra.mxu0 %v321
    %357 = vmatprep.subr.mxu0 0.0
    %358 = vmatpush1.msra.mxu0 %v322
    %359 = vmatprep.subr.mxu0 0.0
    %360 = vmatpush1.msra.mxu0 %v323
    %361 = vmatprep.subr.mxu0 0.0
    %362 = vmatpush1.msra.mxu0 %v324
    %363 = vmatprep.subr.mxu0 0.0
    %364 = vmatpush1.msra.mxu0 %v325
    %365 = vmatprep.subr.mxu0 0.0
    %366 = vmatpush1.msra.mxu0 0.0
    %367 = vmatprep.subr.mxu0 0.0
    %368 = vmatpush1.msra.mxu0 0.0
    %369 = vmatprep.subr.mxu0 0.0
    %370 = vmatpush1.msra.mxu0 0.0
    %371 = vmatprep.subr.mxu0 0.0
    %372 = vmatpush1.msra.mxu0 0.0
    %373 = vmatprep.subr.mxu0 0.0
    %374 = vmatpush1.msra.mxu0 0.0
    %375 = vmatprep.subr.mxu0 0.0
    %376 = vmatpush1.msra.mxu0 0.0
    %377 = vmatprep.subr.mxu0 0.0
    %378 = vmatpush1.msra.mxu0 0.0
    %379 = vmatprep.subr.mxu0 0.0
    %380 = vmatpush1.msra.mxu0 0.0
    %381 = vmatprep.subr.mxu0 0.0
    %382 = vmatpush1.msra.mxu0 0.0
    %383 = vmatprep.subr.mxu0 0.0
    %384 = vmatpush1.msra.mxu0 0.0
    %385 = vmatprep.subr.mxu0 0.0
    %386 = vmatpush1.msra.mxu0 0.0
    %387 = vmatprep.subr.mxu0 0.0
    %388 = vmatpush1.msra.mxu0 0.0
    %389 = vmatprep.subr.mxu0 0.0
    %390 = vmatpush1.msra.mxu0 0.0
    %391 = vmatprep.subr.mxu0 0.0
    %392 = vmatpush1.msra.mxu0 0.0
    %393 = vmatprep.subr.mxu0 0.0
    %394 = vmatpush1.msra.mxu0 0.0
    %395 = vmatprep.subr.mxu0 0.0
    %396 = vmatpush1.msra.mxu0 0.0
    %397 = vmatprep.mubr.f32.mxu0 0.0
    %398 = vmatmul.mubr.f32.gmra.mrb[0].mxu0 %v308
    %v399 = vpop.f32.mrb[0].mxu0
    %v400 = vadd.f32 %v331, %v399
    %v401 = vpop.f32.mrb[0].mxu0
    %402 = vmatprep.mubr.f32.mxu0 0.0
    %403 = vmatmul.mubr.f32.gmra.mrb[0].mxu0 %v309
    %v404 = vpop.f32.mrb[0].mxu0
    %v405 = vadd.f32 %v331, %v404
    %v406 = vpop.f32.mrb[0].mxu0
    %407 = vdwg.mxu0
    %v408 = vld [vmem:[%s8] sm:$0xff]
    %v409 = vld [vmem:[%s8 + $0x8] sm:$0xff]
    %v410 = vld [vmem:[%s8 + $0x10] sm:$0xff]
    %v411 = vld [vmem:[%s8 + $0x18] sm:$0xff]
    %v412 = vld [vmem:[%s8 + $0x20] sm:$0xff]
    %v413 = vld [vmem:[%s8 + $0x28] sm:$0xff]
    %v414 = vld [vmem:[%s8 + $0x30] sm:$0xff]
    %v415 = vld [vmem:[%s8 + $0x38] sm:$0xff]
    %v416 = vld [vmem:[%s8 + $0x40] sm:$0xff]
    %v417 = vld [vmem:[%s8 + $0x48] sm:$0xff]
    %v418 = vld [vmem:[%s8 + $0x50] sm:$0xff]
    %v419 = vld [vmem:[%s8 + $0x58] sm:$0xff]
    %v420 = vld [vmem:[%s8 + $0x60] sm:$0xff]
    %v421 = vld [vmem:[%s8 + $0x68] sm:$0xff]
    %v422 = vld [vmem:[%s8 + $0x70] sm:$0xff]
    %v423 = vld [vmem:[%s8 + $0x78] sm:$0xff]
    %v424 = vld [vmem:[#allocation10] sm:$0x1]
    %v426 = vlaneseq
    %v427 = vshrl.u32 %v426, 7
    %v428 = vsub.s32 0, %v427
    %v429 = vrot.slane %v424, %v428
    %431 = vmatprep.subr.mxu0 0.0
    %432 = vmatpush1.msra.mxu0 %v408
    %433 = vmatprep.subr.mxu0 0.0
    %434 = vmatpush1.msra.mxu0 %v409
    %435 = vmatprep.subr.mxu0 0.0
    %436 = vmatpush1.msra.mxu0 %v410
    %437 = vmatprep.subr.mxu0 0.0
    %438 = vmatpush1.msra.mxu0 %v411
    %439 = vmatprep.subr.mxu0 0.0
    %440 = vmatpush1.msra.mxu0 %v412
    %441 = vmatprep.subr.mxu0 0.0
    %442 = vmatpush1.msra.mxu0 %v413
    %443 = vmatprep.subr.mxu0 0.0
    %444 = vmatpush1.msra.mxu0 %v414
    %445 = vmatprep.subr.mxu0 0.0
    %446 = vmatpush1.msra.mxu0 %v415
    %447 = vmatprep.subr.mxu0 0.0
    %448 = vmatpush1.msra.mxu0 %v416
    %449 = vmatprep.subr.mxu0 0.0
    %450 = vmatpush1.msra.mxu0 %v417
    %451 = vmatprep.subr.mxu0 0.0
    %452 = vmatpush1.msra.mxu0 %v418
    %453 = vmatprep.subr.mxu0 0.0
    %454 = vmatpush1.msra.mxu0 %v419
    %455 = vmatprep.subr.mxu0 0.0
    %456 = vmatpush1.msra.mxu0 %v420
    %457 = vmatprep.subr.mxu0 0.0
    %458 = vmatpush1.msra.mxu0 %v421
    %459 = vmatprep.subr.mxu0 0.0
    %460 = vmatpush1.msra.mxu0 %v422
    %461 = vmatprep.subr.mxu0 0.0
    %462 = vmatpush1.msra.mxu0 %v423
    %463 = vmatprep.subr.mxu0 0.0
    %464 = vmatpush1.msra.mxu0 0.0
    %465 = vmatprep.subr.mxu0 0.0
    %466 = vmatpush1.msra.mxu0 0.0
    %467 = vmatprep.subr.mxu0 0.0
    %468 = vmatpush1.msra.mxu0 0.0
    %469 = vmatprep.subr.mxu0 0.0
    %470 = vmatpush1.msra.mxu0 0.0
    %471 = vmatprep.subr.mxu0 0.0
    %472 = vmatpush1.msra.mxu0 0.0
    %473 = vmatprep.subr.mxu0 0.0
    %474 = vmatpush1.msra.mxu0 0.0
    %475 = vmatprep.subr.mxu0 0.0
    %476 = vmatpush1.msra.mxu0 0.0
    %477 = vmatprep.subr.mxu0 0.0
    %478 = vmatpush1.msra.mxu0 0.0
    %479 = vmatprep.subr.mxu0 0.0
    %480 = vmatpush1.msra.mxu0 0.0
    %481 = vmatprep.subr.mxu0 0.0
    %482 = vmatpush1.msra.mxu0 0.0
    %483 = vmatprep.subr.mxu0 0.0
    %484 = vmatpush1.msra.mxu0 0.0
    %485 = vmatprep.subr.mxu0 0.0
    %486 = vmatpush1.msra.mxu0 0.0
    %487 = vmatprep.subr.mxu0 0.0
    %488 = vmatpush1.msra.mxu0 0.0
    %489 = vmatprep.subr.mxu0 0.0
    %490 = vmatpush1.msra.mxu0 0.0
    %491 = vmatprep.subr.mxu0 0.0
    %492 = vmatpush1.msra.mxu0 0.0
    %493 = vmatprep.subr.mxu0 0.0
    %494 = vmatpush1.msra.mxu0 0.0
    %495 = vmatprep.mubr.f32.mxu0 0.0
    %496 = vmatmul.mubr.f32.gmra.mrb[0].mxu0 %v207
    %v497 = vpop.f32.mrb[0].mxu0
    %v498 = vadd.f32 %v429, %v497
    %v499 = vpop.f32.mrb[0].mxu0
    %500 = vmatprep.mubr.f32.mxu0 0.0
    %501 = vmatmul.mubr.f32.gmra.mrb[0].mxu0 %v209
    %v502 = vpop.f32.mrb[0].mxu0
    %v503 = vadd.f32 %v429, %v502
    %v504 = vpop.f32.mrb[0].mxu0
    %505 = vdwg.mxu0
    %v506 = vmax.f32 %v498, 0.0
    %v507 = vmax.f32 %v503, 0.0
    %v508 = vld [vmem:[%s10] sm:$0xff]
    %v509 = vld [vmem:[%s10 + $0x8] sm:$0xff]
    %v510 = vld [vmem:[%s10 + $0x10] sm:$0xff]
    %v511 = vld [vmem:[%s10 + $0x18] sm:$0xff]
    %v512 = vld [vmem:[%s10 + $0x20] sm:$0xff]
    %v513 = vld [vmem:[%s10 + $0x28] sm:$0xff]
    %v514 = vld [vmem:[%s10 + $0x30] sm:$0xff]
    %v515 = vld [vmem:[%s10 + $0x38] sm:$0xff]
    %v516 = vld [vmem:[%s10 + $0x40] sm:$0xff]
    %v517 = vld [vmem:[%s10 + $0x48] sm:$0xff]
    %v518 = vld [vmem:[%s10 + $0x50] sm:$0xff]
    %v519 = vld [vmem:[%s10 + $0x58] sm:$0xff]
    %v520 = vld [vmem:[%s10 + $0x60] sm:$0xff]
    %v521 = vld [vmem:[%s10 + $0x68] sm:$0xff]
    %v522 = vld [vmem:[%s10 + $0x70] sm:$0xff]
    %v523 = vld [vmem:[%s10 + $0x78] sm:$0xff]
    %v524 = vld [vmem:[%s11] sm:$0x1]
    %v526 = vlaneseq
    %v527 = vshrl.u32 %v526, 7
    %v528 = vsub.s32 0, %v527
    %v529 = vrot.slane %v524, %v528
    %531 = vmatprep.subr.mxu0 0.0
    %532 = vmatpush1.msra.mxu0 %v508
    %533 = vmatprep.subr.mxu0 0.0
    %534 = vmatpush1.msra.mxu0 %v509
    %535 = vmatprep.subr.mxu0 0.0
    %536 = vmatpush1.msra.mxu0 %v510
    %537 = vmatprep.subr.mxu0 0.0
    %538 = vmatpush1.msra.mxu0 %v511
    %539 = vmatprep.subr.mxu0 0.0
    %540 = vmatpush1.msra.mxu0 %v512
    %541 = vmatprep.subr.mxu0 0.0
    %542 = vmatpush1.msra.mxu0 %v513
    %543 = vmatprep.subr.mxu0 0.0
    %544 = vmatpush1.msra.mxu0 %v514
    %545 = vmatprep.subr.mxu0 0.0
    %546 = vmatpush1.msra.mxu0 %v515
    %547 = vmatprep.subr.mxu0 0.0
    %548 = vmatpush1.msra.mxu0 %v516
    %549 = vmatprep.subr.mxu0 0.0
    %550 = vmatpush1.msra.mxu0 %v517
    %551 = vmatprep.subr.mxu0 0.0
    %552 = vmatpush1.msra.mxu0 %v518
    %553 = vmatprep.subr.mxu0 0.0
    %554 = vmatpush1.msra.mxu0 %v519
    %555 = vmatprep.subr.mxu0 0.0
    %556 = vmatpush1.msra.mxu0 %v520
    %557 = vmatprep.subr.mxu0 0.0
    %558 = vmatpush1.msra.mxu0 %v521
    %559 = vmatprep.subr.mxu0 0.0
    %560 = vmatpush1.msra.mxu0 %v522
    %561 = vmatprep.subr.mxu0 0.0
    %562 = vmatpush1.msra.mxu0 %v523
    %563 = vmatprep.subr.mxu0 0.0
    %564 = vmatpush1.msra.mxu0 0.0
    %565 = vmatprep.subr.mxu0 0.0
    %566 = vmatpush1.msra.mxu0 0.0
    %567 = vmatprep.subr.mxu0 0.0
    %568 = vmatpush1.msra.mxu0 0.0
    %569 = vmatprep.subr.mxu0 0.0
    %570 = vmatpush1.msra.mxu0 0.0
    %571 = vmatprep.subr.mxu0 0.0
    %572 = vmatpush1.msra.mxu0 0.0
    %573 = vmatprep.subr.mxu0 0.0
    %574 = vmatpush1.msra.mxu0 0.0
    %575 = vmatprep.subr.mxu0 0.0
    %576 = vmatpush1.msra.mxu0 0.0
    %577 = vmatprep.subr.mxu0 0.0
    %578 = vmatpush1.msra.mxu0 0.0
    %579 = vmatprep.subr.mxu0 0.0
    %580 = vmatpush1.msra.mxu0 0.0
    %581 = vmatprep.subr.mxu0 0.0
    %582 = vmatpush1.msra.mxu0 0.0
    %583 = vmatprep.subr.mxu0 0.0
    %584 = vmatpush1.msra.mxu0 0.0
    %585 = vmatprep.subr.mxu0 0.0
    %586 = vmatpush1.msra.mxu0 0.0
    %587 = vmatprep.subr.mxu0 0.0
    %588 = vmatpush1.msra.mxu0 0.0
    %589 = vmatprep.subr.mxu0 0.0
    %590 = vmatpush1.msra.mxu0 0.0
    %591 = vmatprep.subr.mxu0 0.0
    %592 = vmatpush1.msra.mxu0 0.0
    %593 = vmatprep.subr.mxu0 0.0
    %594 = vmatpush1.msra.mxu0 0.0
    %595 = vmatprep.mubr.f32.mxu0 0.0
    %596 = vmatmul.mubr.f32.gmra.mrb[0].mxu0 %v506
    %v597 = vpop.f32.mrb[0].mxu0
    %v598 = vadd.f32 %v529, %v597
    %v599 = vpop.f32.mrb[0].mxu0
    %600 = vmatprep.mubr.f32.mxu0 0.0
    %601 = vmatmul.mubr.f32.gmra.mrb[0].mxu0 %v507
    %v602 = vpop.f32.mrb[0].mxu0
    %v603 = vadd.f32 %v529, %v602
    %v604 = vpop.f32.mrb[0].mxu0
    %605 = vdwg.mxu0
    %v606 = vadd.f32 %v405, %v603
    %v607 = vmul.f32 %v400, %v606
    %v608 = vsub.f32 %v603, %v405
    %v609 = vmul.f32 %v598, %v608
    %v610 = vadd.f32 %v607, %v609
    %v612 = vsel %vm122, 1.0, 0
    %v615 = vsel %vm122, %v610, 0
    %617 = vmatprep.subr.mxu0 0.0
    %618 = vmatpush1.xpose.msra.mxu0 %v615
    %619 = vmatprep.subr.mxu0 0.0
    %620 = vmatpush1.xpose.msra.mxu0 0.0
    %621 = vmatprep.subr.mxu0 0.0
    %622 = vmatpush1.xpose.msra.mxu0 0.0
    %623 = vmatprep.subr.mxu0 0.0
    %624 = vmatpush1.xpose.msra.mxu0 0.0
    %625 = vmatprep.subr.mxu0 0.0
    %626 = vmatpush1.xpose.msra.mxu0 0.0
    %627 = vmatprep.subr.mxu0 0.0
    %628 = vmatpush1.xpose.msra.mxu0 0.0
    %629 = vmatprep.subr.mxu0 0.0
    %630 = vmatpush1.xpose.msra.mxu0 0.0
    %631 = vmatprep.subr.mxu0 0.0
    %632 = vmatpush1.xpose.msra.mxu0 0.0
    %633 = vmatprep.subr.mxu0 0.0
    %634 = vmatpush1.xpose.msra.mxu0 0.0
    %635 = vmatprep.subr.mxu0 0.0
    %636 = vmatpush1.xpose.msra.mxu0 0.0
    %637 = vmatprep.subr.mxu0 0.0
    %638 = vmatpush1.xpose.msra.mxu0 0.0
    %639 = vmatprep.subr.mxu0 0.0
    %640 = vmatpush1.xpose.msra.mxu0 0.0
    %641 = vmatprep.subr.mxu0 0.0
    %642 = vmatpush1.xpose.msra.mxu0 0.0
    %643 = vmatprep.subr.mxu0 0.0
    %644 = vmatpush1.xpose.msra.mxu0 0.0
    %645 = vmatprep.subr.mxu0 0.0
    %646 = vmatpush1.xpose.msra.mxu0 0.0
    %647 = vmatprep.subr.mxu0 0.0
    %648 = vmatpush1.xpose.msra.mxu0 0.0
    %649 = vmatprep.subr.mxu0 0.0
    %650 = vmatpush1.xpose.msra.mxu0 0.0
    %651 = vmatprep.subr.mxu0 0.0
    %652 = vmatpush1.xpose.msra.mxu0 0.0
    %653 = vmatprep.subr.mxu0 0.0
    %654 = vmatpush1.xpose.msra.mxu0 0.0
    %655 = vmatprep.subr.mxu0 0.0
    %656 = vmatpush1.xpose.msra.mxu0 0.0
    %657 = vmatprep.subr.mxu0 0.0
    %658 = vmatpush1.xpose.msra.mxu0 0.0
    %659 = vmatprep.subr.mxu0 0.0
    %660 = vmatpush1.xpose.msra.mxu0 0.0
    %661 = vmatprep.subr.mxu0 0.0
    %662 = vmatpush1.xpose.msra.mxu0 0.0
    %663 = vmatprep.subr.mxu0 0.0
    %664 = vmatpush1.xpose.msra.mxu0 0.0
    %665 = vmatprep.subr.mxu0 0.0
    %666 = vmatpush1.xpose.msra.mxu0 0.0
    %667 = vmatprep.subr.mxu0 0.0
    %668 = vmatpush1.xpose.msra.mxu0 0.0
    %669 = vmatprep.subr.mxu0 0.0
    %670 = vmatpush1.xpose.msra.mxu0 0.0
    %671 = vmatprep.subr.mxu0 0.0
    %672 = vmatpush1.xpose.msra.mxu0 0.0
    %673 = vmatprep.subr.mxu0 0.0
    %674 = vmatpush1.xpose.msra.mxu0 0.0
    %675 = vmatprep.subr.mxu0 0.0
    %676 = vmatpush1.xpose.msra.mxu0 0.0
    %677 = vmatprep.subr.mxu0 0.0
    %678 = vmatpush1.xpose.msra.mxu0 0.0
    %679 = vmatprep.subr.mxu0 0.0
    %680 = vmatpush1.xpose.msra.mxu0 0.0
    %681 = vmatprep.mubr.f32.mxu0 0.0
    %682 = vmatmul.mubr.f32.gmra.mrb[0].mxu0 %v612
    %v683 = vpop.f32.mrb[0].mxu0
    %v684 = vadd.f32 0.0, %v683
    %v685 = vpop.f32.mrb[0].mxu0
    %686 = vdwg.mxu0
    %v687 = vand.u32 2147483647, %v684
    %v688 = vsub.f32 0.0, %v687
    %v689 = vmul.f32 %v688, 1.442695
    %v690 = vpow.pop %v689
    %vm691 = vcmp.ge.f32.partialorder %v684, 0.0
    %v692 = vadd.f32 %v690, 1.0
    %v693 = vrcp.pop %v692
    %v694 = vmul.f32 1.0, %v693
    %v695 = vmul.f32 %v690, %v693
    %v696 = vsel %vm691, %v694, %v695
    %v697 = vadd.f32 %v696, 1e-20
    %v698 = vlog2.pop %v697
    %v699 = vmul.f32 %v698, 0.6931472
    %vm700 = vcmask 57344
    %701 = vst.msk [vmem:[#allocation11] sm:$0x1] %vm700, %v699
    // Predicated region
    $region70: #{tpu_custom_call.1} parent=1 // pred_check
      _
    $region71: #{tpu_custom_call.1} parent=1 // pred_check_branch
      %703 = sbr.rel (0) target = $region73
    $region72: #{tpu_custom_call.1} parent=1 // pred_region
      %s705 = ssub.s32 16, 16
      %706 = vsyncadd [#allocation4], %s705
      %s708 = sshll.u32 [#allocation11], 4
      %s709 = int_to_ptr.vmem [resolvable:$true] %s708
      %711 = dma.vmem_to_hbm [thread:$0]  %s709, 16, %s12, [#allocation4]
    $region73: #{tpu_custom_call.1} parent=1 // pred_fallthru
      _
    // Predicated region
    $region74: #{tpu_custom_call.1} parent=1 // pred_check
      _
    $region75: #{tpu_custom_call.1} parent=1 // pred_check_branch
      %713 = sbr.rel (0) target = $region77
    $region76: #{tpu_custom_call.1} parent=1 // pred_region
      %714 = dma.done [#allocation4], 16
    $region77: #{tpu_custom_call.1} parent=1 // pred_fallthru
      _
    %715 = vsyncpa [#allocation3], 1
    %716 = vsyncpa [#allocation6], 1
    %717 = vsyncpa [#allocation9], 1
    %718 = vsyncpa [#allocation4], 1

</llo_original>
